<compile_context>
chip_gen: v7x
topology: tpu7x:2x2x1
jax: 0.10.0
libtpu: 0.0.40
codegen_flags: <defaults>
</compile_context>

<pallas_src>
import numpy as np
import jax
import jax.numpy as jnp
from jax import lax
from jax.experimental import pallas as pl
from jax.experimental.pallas import tpu as pltpu


def fused_double_conv3x3_relu_kernel(x_ref, w1_ref, b1_ref, w2_ref, b2_ref,
                                     o_ref, mid_ref):
    """Fused conv3x3+ReLU -> conv3x3+ReLU for one batch element.

    x_ref  : (1, H+2, W*Cin)   f32, input rows padded by 1 row top/bottom,
                               width & channels flattened onto lanes.
    w1_ref : (3, W*Cin,  W*Cout) bf16 banded weights (dx taps + W-padding folded in)
    b1_ref : (1, W*Cout)       f32 lane-dense bias (b1 tiled W times)
    w2_ref : (3, W*Cout, W*Cout) bf16 banded weights for stage 2
    b2_ref : (1, W*Cout)       f32
    o_ref  : (1, H, W*Cout)    f32 lane-dense output
    mid_ref: (H+2, W*Cout)     f32 VMEM scratch, row-padded intermediate
    """
    H = o_ref.shape[1]

    # ---------------- stage 1: conv3x3 + bias + ReLU ----------------
    xt = x_ref[0].astype(jnp.bfloat16)                       # (H+2, W*Cin)
    acc = jnp.dot(xt[0:H, :], w1_ref[0], preferred_element_type=jnp.float32)
    acc += jnp.dot(xt[1:H + 1, :], w1_ref[1], preferred_element_type=jnp.float32)
    acc += jnp.dot(xt[2:H + 2, :], w1_ref[2], preferred_element_type=jnp.float32)
    y1 = jnp.maximum(acc + b1_ref[...], 0.0)                 # (H, W*Cout) f32

    # Keep the intermediate in VMEM with one zero row above and below
    # (row padding for the second conv); never touches HBM.
    mid_ref[...] = jnp.zeros_like(mid_ref)
    mid_ref[1:H + 1, :] = y1

    # ---------------- stage 2: conv3x3 + bias + ReLU ----------------
    mt = mid_ref[...].astype(jnp.bfloat16)                   # (H+2, W*Cout)
    acc2 = jnp.dot(mt[0:H, :], w2_ref[0], preferred_element_type=jnp.float32)
    acc2 += jnp.dot(mt[1:H + 1, :], w2_ref[1], preferred_element_type=jnp.float32)
    acc2 += jnp.dot(mt[2:H + 2, :], w2_ref[2], preferred_element_type=jnp.float32)
    y2 = jnp.maximum(acc2 + b2_ref[...], 0.0)                # (H, W*Cout) f32

    o_ref[0] = y2.astype(o_ref.dtype)


def _band_weights(w_hwio, W):
    """Fold the dx taps and the width zero-padding of a 3x3 conv into a
    block-banded matrix B of shape (3, W*Cin, W*Cout) such that

        out[h, w*Cout+co] = sum_dy  xrows[h+dy] @ B[dy]

    where xrows is the H-padded input with (W, Cin) flattened onto lanes.
    """
    kh, kw, cin, cout = w_hwio.shape
    # shift[dx, wi, w] = 1  iff  wi == w + dx - 1  (taps outside [0, W) drop out,
    # which implements the width zero-padding for free).
    shift = np.stack([np.eye(W, k=1 - dx) for dx in range(kw)])        # (3, W, W)
    shift = jnp.asarray(shift, dtype=w_hwio.dtype)
    band = jnp.einsum('xvw,yxio->yviwo', shift, w_hwio)                # (3,W,Cin,W,Cout)
    return band.reshape(kh, W * cin, W * cout)


@jax.jit
def mspam_basic_forward(x_nchw, params):
    """Equivalent of MSPAM_Basic.forward: conv3x3+ReLU -> conv3x3+ReLU."""
    N, Cin, H, W = x_nchw.shape
    Cout = params["b1"].shape[0]
    WCin, WCout = W * Cin, W * Cout

    # NCHW -> NHWC, pad rows only (width padding is folded into the band
    # weights), flatten (W, C) onto the lane axis.
    x = jnp.transpose(x_nchw, (0, 2, 3, 1))
    x = jnp.pad(x, ((0, 0), (1, 1), (0, 0), (0, 0)))
    xrows = x.reshape(N, H + 2, WCin).astype(jnp.float32)

    w1b = _band_weights(params["w1"], W).astype(jnp.bfloat16)   # (3, WCin,  WCout)
    w2b = _band_weights(params["w2"], W).astype(jnp.bfloat16)   # (3, WCout, WCout)
    b1d = jnp.tile(params["b1"], W).reshape(1, WCout).astype(jnp.float32)
    b2d = jnp.tile(params["b2"], W).reshape(1, WCout).astype(jnp.float32)

    out = pl.pallas_call(
        fused_double_conv3x3_relu_kernel,
        out_shape=jax.ShapeDtypeStruct((N, H, WCout), jnp.float32),
        grid=(N,),
        in_specs=[
            pl.BlockSpec((1, H + 2, WCin), lambda n: (n, 0, 0)),
            pl.BlockSpec((3, WCin, WCout), lambda n: (0, 0, 0)),
            pl.BlockSpec((1, WCout), lambda n: (0, 0)),
            pl.BlockSpec((3, WCout, WCout), lambda n: (0, 0, 0)),
            pl.BlockSpec((1, WCout), lambda n: (0, 0)),
        ],
        out_specs=pl.BlockSpec((1, H, WCout), lambda n: (n, 0, 0)),
        scratch_shapes=[pltpu.VMEM((H + 2, WCout), jnp.float32)],
        compiler_params=pltpu.CompilerParams(
            dimension_semantics=("parallel",)),
    )(xrows, w1b, b1d, w2b, b2d)

    out = out.reshape(N, H, W, Cout)
    return jnp.transpose(out, (0, 3, 1, 2))                    # NHWC -> NCHW


def _ref_conv_relu(x_nchw, w_oihw, b):
    y = lax.conv_general_dilated(
        x_nchw, w_oihw, window_strides=(1, 1), padding="SAME",
        dimension_numbers=("NCHW", "OIHW", "NCHW"))
    return jnp.maximum(y + b[None, :, None, None], 0.0)


if __name__ == "__main__":
    key = jax.random.PRNGKey(0)
    N, Cin, H, W = 2, 4, 16, 16
    Cout = 8

    k1, k2, k3, k4, k5 = jax.random.split(key, 5)
    x = jax.random.normal(k1, (N, Cin, H, W), dtype=jnp.float32)

    # Deterministic synthetic parameters (PyTorch Conv2d weight layout: OIHW).
    w1_oihw = jax.random.normal(k2, (Cout, Cin, 3, 3), jnp.float32) * 0.1
    b1 = jax.random.normal(k3, (Cout,), jnp.float32) * 0.1
    w2_oihw = jax.random.normal(k4, (Cout, Cout, 3, 3), jnp.float32) * 0.1
    b2 = jax.random.normal(k5, (Cout,), jnp.float32) * 0.1

    params = {
        "w1": jnp.transpose(w1_oihw, (2, 3, 1, 0)),    # OIHW -> HWIO
        "b1": b1,
        "w2": jnp.transpose(w2_oihw, (2, 3, 1, 0)),
        "b2": b2,
    }

    out = jax.block_until_ready(mspam_basic_forward(x, params))

    # Reference is pure-f32 XLA conv; the kernel feeds bf16 into the MXU
    # (f32 accumulation/epilogue), so tolerances are bf16-level.
    ref = _ref_conv_relu(_ref_conv_relu(x, w1_oihw, b1), w2_oihw, b2)
    assert out.shape == (N, Cout, H, W)
    max_err = float(jnp.max(jnp.abs(out - ref)))
    assert jnp.allclose(out, ref, atol=5e-2, rtol=5e-2), max_err

    print("KERNEL_OK")
</pallas_src>

<mosaic_0001>
module attributes {stable_mosaic.version = 11 : i64} {
  func.func @fused_double_conv3x3_relu_kernel(%arg0: i32, %arg1: memref<1x18x64xf32, #tpu.memory_space<vmem>>, %arg2: memref<3x64x128xbf16, #tpu.memory_space<vmem>>, %arg3: memref<1x128xf32, #tpu.memory_space<vmem>>, %arg4: memref<3x128x128xbf16, #tpu.memory_space<vmem>>, %arg5: memref<1x128xf32, #tpu.memory_space<vmem>>, %arg6: memref<1x16x128xf32, #tpu.memory_space<vmem>>, %arg7: memref<18x128xf32, #tpu.memory_space<vmem>>) attributes {dimension_semantics = [#tpu.dimension_semantics<parallel>], iteration_bounds = array<i64: 2>, scalar_prefetch = 0 : i64, scratch_operands = 1 : i64, tpu.core_type = #tpu.core_type<tc>, window_params = [{transform_indices = @transform_0, window_bounds = array<i64: 1, 18, 64>}, {pipeline_mode = #tpu.pipeline_mode<synchronous>, transform_indices = @transform_1, window_bounds = array<i64: 3, 64, 128>}, {pipeline_mode = #tpu.pipeline_mode<synchronous>, transform_indices = @transform_2, window_bounds = array<i64: 1, 128>}, {pipeline_mode = #tpu.pipeline_mode<synchronous>, transform_indices = @transform_3, window_bounds = array<i64: 3, 128, 128>}, {pipeline_mode = #tpu.pipeline_mode<synchronous>, transform_indices = @transform_4, window_bounds = array<i64: 1, 128>}, {transform_indices = @transform_5, window_bounds = array<i64: 1, 16, 128>}]} {
    %c0 = arith.constant 0 : index
    %c0_0 = arith.constant 0 : index
    %c0_1 = arith.constant 0 : index
    %0 = vector.load %arg1[%c0, %c0_0, %c0_1] : memref<1x18x64xf32, #tpu.memory_space<vmem>>, vector<1x18x64xf32>
    %1 = vector.shape_cast %0 : vector<1x18x64xf32> to vector<18x64xf32>
    %2 = arith.truncf %1 : vector<18x64xf32> to vector<18x64xbf16>
    %3 = vector.extract_strided_slice %2 {offsets = [0, 0], sizes = [16, 64], strides = [1, 1]} : vector<18x64xbf16> to vector<16x64xbf16>
    %c0_2 = arith.constant 0 : index
    %c0_3 = arith.constant 0 : index
    %c0_4 = arith.constant 0 : index
    %4 = vector.load %arg2[%c0_2, %c0_3, %c0_4] : memref<3x64x128xbf16, #tpu.memory_space<vmem>>, vector<1x64x128xbf16>
    %5 = vector.shape_cast %4 : vector<1x64x128xbf16> to vector<64x128xbf16>
    %cst = arith.constant dense<0.000000e+00> : vector<16x128xf32>
    %6 = tpu.matmul %3, %5, %cst {dimension_numbers = #tpu.dot_dimension_numbers<[1], [0], [0], [1], [0, 0, 1, 1], [], []>} : vector<16x64xbf16>, vector<64x128xbf16>, vector<16x128xf32> -> vector<16x128xf32>
    %7 = vector.extract_strided_slice %2 {offsets = [1, 0], sizes = [16, 64], strides = [1, 1]} : vector<18x64xbf16> to vector<16x64xbf16>
    %c1 = arith.constant 1 : index
    %c0_5 = arith.constant 0 : index
    %c0_6 = arith.constant 0 : index
    %8 = vector.load %arg2[%c1, %c0_5, %c0_6] : memref<3x64x128xbf16, #tpu.memory_space<vmem>>, vector<1x64x128xbf16>
    %9 = vector.shape_cast %8 : vector<1x64x128xbf16> to vector<64x128xbf16>
    %cst_7 = arith.constant dense<0.000000e+00> : vector<16x128xf32>
    %10 = tpu.matmul %7, %9, %cst_7 {dimension_numbers = #tpu.dot_dimension_numbers<[1], [0], [0], [1], [0, 0, 1, 1], [], []>} : vector<16x64xbf16>, vector<64x128xbf16>, vector<16x128xf32> -> vector<16x128xf32>
    %11 = arith.addf %6, %10 : vector<16x128xf32>
    %12 = vector.extract_strided_slice %2 {offsets = [2, 0], sizes = [16, 64], strides = [1, 1]} : vector<18x64xbf16> to vector<16x64xbf16>
    %c2 = arith.constant 2 : index
    %c0_8 = arith.constant 0 : index
    %c0_9 = arith.constant 0 : index
    %13 = vector.load %arg2[%c2, %c0_8, %c0_9] : memref<3x64x128xbf16, #tpu.memory_space<vmem>>, vector<1x64x128xbf16>
    %14 = vector.shape_cast %13 : vector<1x64x128xbf16> to vector<64x128xbf16>
    %cst_10 = arith.constant dense<0.000000e+00> : vector<16x128xf32>
    %15 = tpu.matmul %12, %14, %cst_10 {dimension_numbers = #tpu.dot_dimension_numbers<[1], [0], [0], [1], [0, 0, 1, 1], [], []>} : vector<16x64xbf16>, vector<64x128xbf16>, vector<16x128xf32> -> vector<16x128xf32>
    %16 = arith.addf %11, %15 : vector<16x128xf32>
    %c0_11 = arith.constant 0 : index
    %c0_12 = arith.constant 0 : index
    %17 = vector.load %arg3[%c0_11, %c0_12] : memref<1x128xf32, #tpu.memory_space<vmem>>, vector<1x128xf32>
    %18 = vector.broadcast %17 : vector<1x128xf32> to vector<16x128xf32>
    %19 = arith.addf %16, %18 : vector<16x128xf32>
    %cst_13 = arith.constant 0.000000e+00 : f32
    %20 = vector.broadcast %cst_13 : f32 to vector<16x128xf32>
    %21 = arith.maximumf %19, %20 : vector<16x128xf32>
    %cst_14 = arith.constant 0.000000e+00 : f32
    %22 = vector.broadcast %cst_14 : f32 to vector<18x128xf32>
    %c0_15 = arith.constant 0 : index
    %c0_16 = arith.constant 0 : index
    %23 = vector.load %arg7[%c0_15, %c0_16] : memref<18x128xf32, #tpu.memory_space<vmem>>, vector<18x128xf32>
    tpu.vector_store %arg7[%c0_15, %c0_16], %22 {strides = array<i32>} : memref<18x128xf32, #tpu.memory_space<vmem>>, vector<18x128xf32>,
    %c1_17 = arith.constant 1 : index
    %c0_18 = arith.constant 0 : index
    %24 = vector.load %arg7[%c1_17, %c0_18] : memref<18x128xf32, #tpu.memory_space<vmem>>, vector<16x128xf32>
    tpu.vector_store %arg7[%c1_17, %c0_18], %21 {strides = array<i32>} : memref<18x128xf32, #tpu.memory_space<vmem>>, vector<16x128xf32>,
    %c0_19 = arith.constant 0 : index
    %c0_20 = arith.constant 0 : index
    %25 = vector.load %arg7[%c0_19, %c0_20] : memref<18x128xf32, #tpu.memory_space<vmem>>, vector<18x128xf32>
    %26 = arith.truncf %25 : vector<18x128xf32> to vector<18x128xbf16>
    %27 = vector.extract_strided_slice %26 {offsets = [0, 0], sizes = [16, 128], strides = [1, 1]} : vector<18x128xbf16> to vector<16x128xbf16>
    %c0_21 = arith.constant 0 : index
    %c0_22 = arith.constant 0 : index
    %c0_23 = arith.constant 0 : index
    %28 = vector.load %arg4[%c0_21, %c0_22, %c0_23] : memref<3x128x128xbf16, #tpu.memory_space<vmem>>, vector<1x128x128xbf16>
    %29 = vector.shape_cast %28 : vector<1x128x128xbf16> to vector<128x128xbf16>
    %cst_24 = arith.constant dense<0.000000e+00> : vector<16x128xf32>
    %30 = tpu.matmul %27, %29, %cst_24 {dimension_numbers = #tpu.dot_dimension_numbers<[1], [0], [0], [1], [0, 0, 1, 1], [], []>} : vector<16x128xbf16>, vector<128x128xbf16>, vector<16x128xf32> -> vector<16x128xf32>
    %31 = vector.extract_strided_slice %26 {offsets = [1, 0], sizes = [16, 128], strides = [1, 1]} : vector<18x128xbf16> to vector<16x128xbf16>
    %c1_25 = arith.constant 1 : index
    %c0_26 = arith.constant 0 : index
    %c0_27 = arith.constant 0 : index
    %32 = vector.load %arg4[%c1_25, %c0_26, %c0_27] : memref<3x128x128xbf16, #tpu.memory_space<vmem>>, vector<1x128x128xbf16>
    %33 = vector.shape_cast %32 : vector<1x128x128xbf16> to vector<128x128xbf16>
    %cst_28 = arith.constant dense<0.000000e+00> : vector<16x128xf32>
    %34 = tpu.matmul %31, %33, %cst_28 {dimension_numbers = #tpu.dot_dimension_numbers<[1], [0], [0], [1], [0, 0, 1, 1], [], []>} : vector<16x128xbf16>, vector<128x128xbf16>, vector<16x128xf32> -> vector<16x128xf32>
    %35 = arith.addf %30, %34 : vector<16x128xf32>
    %36 = vector.extract_strided_slice %26 {offsets = [2, 0], sizes = [16, 128], strides = [1, 1]} : vector<18x128xbf16> to vector<16x128xbf16>
    %c2_29 = arith.constant 2 : index
    %c0_30 = arith.constant 0 : index
    %c0_31 = arith.constant 0 : index
    %37 = vector.load %arg4[%c2_29, %c0_30, %c0_31] : memref<3x128x128xbf16, #tpu.memory_space<vmem>>, vector<1x128x128xbf16>
    %38 = vector.shape_cast %37 : vector<1x128x128xbf16> to vector<128x128xbf16>
    %cst_32 = arith.constant dense<0.000000e+00> : vector<16x128xf32>
    %39 = tpu.matmul %36, %38, %cst_32 {dimension_numbers = #tpu.dot_dimension_numbers<[1], [0], [0], [1], [0, 0, 1, 1], [], []>} : vector<16x128xbf16>, vector<128x128xbf16>, vector<16x128xf32> -> vector<16x128xf32>
    %40 = arith.addf %35, %39 : vector<16x128xf32>
    %c0_33 = arith.constant 0 : index
    %c0_34 = arith.constant 0 : index
    %41 = vector.load %arg5[%c0_33, %c0_34] : memref<1x128xf32, #tpu.memory_space<vmem>>, vector<1x128xf32>
    %42 = vector.broadcast %41 : vector<1x128xf32> to vector<16x128xf32>
    %43 = arith.addf %40, %42 : vector<16x128xf32>
    %cst_35 = arith.constant 0.000000e+00 : f32
    %44 = vector.broadcast %cst_35 : f32 to vector<16x128xf32>
    %45 = arith.maximumf %43, %44 : vector<16x128xf32>
    %c0_36 = arith.constant 0 : index
    %c0_37 = arith.constant 0 : index
    %c0_38 = arith.constant 0 : index
    %46 = vector.load %arg6[%c0_36, %c0_37, %c0_38] : memref<1x16x128xf32, #tpu.memory_space<vmem>>, vector<1x16x128xf32>
    %47 = vector.shape_cast %46 : vector<1x16x128xf32> to vector<16x128xf32>
    %48 = vector.shape_cast %45 : vector<16x128xf32> to vector<1x16x128xf32>
    tpu.vector_store %arg6[%c0_36, %c0_37, %c0_38], %48 {strides = array<i32>} : memref<1x16x128xf32, #tpu.memory_space<vmem>>, vector<1x16x128xf32>,
    return
  }
  func.func @transform_0(%arg0: i32) -> (i32, i32, i32) {
    %c0_i32 = arith.constant 0 : i32
    %c0_i32_0 = arith.constant 0 : i32
    %c0_i32_1 = arith.constant 0 : i32
    return %arg0, %c0_i32, %c0_i32_0 : i32, i32, i32
  }
  func.func @transform_1(%arg0: i32) -> (i32, i32, i32) {
    %c0_i32 = arith.constant 0 : i32
    %c0_i32_0 = arith.constant 0 : i32
    %c0_i32_1 = arith.constant 0 : i32
    %c0_i32_2 = arith.constant 0 : i32
    return %c0_i32, %c0_i32_0, %c0_i32_1 : i32, i32, i32
  }
  func.func @transform_2(%arg0: i32) -> (i32, i32) {
    %c0_i32 = arith.constant 0 : i32
    %c0_i32_0 = arith.constant 0 : i32
    %c0_i32_1 = arith.constant 0 : i32
    return %c0_i32, %c0_i32_0 : i32, i32
  }
  func.func @transform_3(%arg0: i32) -> (i32, i32, i32) {
    %c0_i32 = arith.constant 0 : i32
    %c0_i32_0 = arith.constant 0 : i32
    %c0_i32_1 = arith.constant 0 : i32
    %c0_i32_2 = arith.constant 0 : i32
    return %c0_i32, %c0_i32_0, %c0_i32_1 : i32, i32, i32
  }
  func.func @transform_4(%arg0: i32) -> (i32, i32) {
    %c0_i32 = arith.constant 0 : i32
    %c0_i32_0 = arith.constant 0 : i32
    %c0_i32_1 = arith.constant 0 : i32
    return %c0_i32, %c0_i32_0 : i32, i32
  }
  func.func @transform_5(%arg0: i32) -> (i32, i32, i32) {
    %c0_i32 = arith.constant 0 : i32
    %c0_i32_0 = arith.constant 0 : i32
    %c0_i32_1 = arith.constant 0 : i32
    return %arg0, %c0_i32, %c0_i32_0 : i32, i32, i32
  }
}

</mosaic_0001>

<llo_original>
// kernel: tile.13
$region0: #{tile.13}
  #allocation0 [shape = 's32[1]{0}', space=sflag, size = 0x4, scoped, tag = 'scoped memory for tile.13']
  %s0 = inlined_call_operand.vmem [shape: f32[8], index: 0, kind: input, shape index: {}]
  %s1 = inlined_call_operand.vmem [shape: f32[16,8], index: 1, kind: output, shape index: {}]
  // Predicated region
  $region2: #{tile.13} parent=0 // pred_check
    _
  $region3: #{tile.13} parent=0 // pred_check_branch
    %3 = sbr.rel (0) target = $region5
  $region4: #{tile.13} parent=0 // pred_region
    _
  $region5: #{tile.13} parent=0 // pred_fallthru
    _
  %v4 = vld [vmem:[%s0] ss:$0 sm:$0xff]
  %5 = vst [vmem:[%s1] sm:$0xff] %v4
  %s6 = scalar_lea.vmem %s1, 8
  %7 = vst [vmem:[%s6] sm:$0xff] %v4

// kernel: tile.14
$region0: #{tile.14}
  %s0 = inlined_call_operand.vmem [shape: f32[16,8], index: 0, kind: input, shape index: {}]
  %s1 = inlined_call_operand.vmem [shape: f32[1,128], index: 1, kind: output, shape index: {}]
  $region1: #{tile.14} parent=0
    #allocation0 [shape = 'u8[4096]{0}', space=vmem, size = 0x1000, scoped, tag = 'scoped mem for output reshape']
    %v2 = vld [vmem:[%s0] sm:$0x1]
    %vm3 = vcmask 64512
    %4 = vst.msk [vmem:[#allocation0] sm:$0x1] %vm3, %v2
    %s5 = scalar_lea.vmem %s0, 15
    %v6 = vld [vmem:[%s5] sm:$0x1]
    %7 = vrot.lane.b32.xlu0 %v6, 120
    %v8 = vpop.permute.xlu0 %7
    %vm9 = vcmask 1048512
    %10 = vst.msk [vmem:[#allocation0] sm:$0x1] %vm9, %v8
    %s11 = scalar_lea.vmem %s0, 14
    %v12 = vld [vmem:[%s11] sm:$0x1]
    %13 = vrot.lane.b32.xlu0 %v12, 112
    %v14 = vpop.permute.xlu0 %13
    %vm15 = vcmask 982912
    %16 = vst.msk [vmem:[#allocation0] sm:$0x1] %vm15, %v14
    %s17 = scalar_lea.vmem %s0, 13
    %v18 = vld [vmem:[%s17] sm:$0x1]
    %19 = vrot.lane.b32.xlu0 %v18, 104
    %v20 = vpop.permute.xlu0 %19
    %vm21 = vcmask 917312
    %22 = vst.msk [vmem:[#allocation0] sm:$0x1] %vm21, %v20
    %s23 = scalar_lea.vmem %s0, 12
    %v24 = vld [vmem:[%s23] sm:$0x1]
    %25 = vrot.lane.b32.xlu0 %v24, 96
    %v26 = vpop.permute.xlu0 %25
    %vm27 = vcmask 851712
    %28 = vst.msk [vmem:[#allocation0] sm:$0x1] %vm27, %v26
    %s29 = scalar_lea.vmem %s0, 11
    %v30 = vld [vmem:[%s29] sm:$0x1]
    %31 = vrot.lane.b32.xlu0 %v30, 88
    %v32 = vpop.permute.xlu0 %31
    %vm33 = vcmask 786112
    %34 = vst.msk [vmem:[#allocation0] sm:$0x1] %vm33, %v32
    %s35 = scalar_lea.vmem %s0, 10
    %v36 = vld [vmem:[%s35] sm:$0x1]
    %37 = vrot.lane.b32.xlu0 %v36, 80
    %v38 = vpop.permute.xlu0 %37
    %vm39 = vcmask 720512
    %40 = vst.msk [vmem:[#allocation0] sm:$0x1] %vm39, %v38
    %s41 = scalar_lea.vmem %s0, 9
    %v42 = vld [vmem:[%s41] sm:$0x1]
    %43 = vrot.lane.b32.xlu0 %v42, 72
    %v44 = vpop.permute.xlu0 %43
    %vm45 = vcmask 654912
    %46 = vst.msk [vmem:[#allocation0] sm:$0x1] %vm45, %v44
    %s47 = scalar_lea.vmem %s0, 8
    %v48 = vld [vmem:[%s47] sm:$0x1]
    %49 = vrot.lane.b32.xlu0 %v48, 64
    %v50 = vpop.permute.xlu0 %49
    %vm51 = vcmask 589312
    %52 = vst.msk [vmem:[#allocation0] sm:$0x1] %vm51, %v50
    %s53 = scalar_lea.vmem %s0, 7
    %v54 = vld [vmem:[%s53] sm:$0x1]
    %55 = vrot.lane.b32.xlu0 %v54, 56
    %v56 = vpop.permute.xlu0 %55
    %vm57 = vcmask 523712
    %58 = vst.msk [vmem:[#allocation0] sm:$0x1] %vm57, %v56
    %s59 = scalar_lea.vmem %s0, 6
    %v60 = vld [vmem:[%s59] sm:$0x1]
    %61 = vrot.lane.b32.xlu0 %v60, 48
    %v62 = vpop.permute.xlu0 %61
    %vm63 = vcmask 458112
    %64 = vst.msk [vmem:[#allocation0] sm:$0x1] %vm63, %v62
    %s65 = scalar_lea.vmem %s0, 5
    %v66 = vld [vmem:[%s65] sm:$0x1]
    %67 = vrot.lane.b32.xlu0 %v66, 40
    %v68 = vpop.permute.xlu0 %67
    %vm69 = vcmask 392512
    %70 = vst.msk [vmem:[#allocation0] sm:$0x1] %vm69, %v68
    %s71 = scalar_lea.vmem %s0, 4
    %v72 = vld [vmem:[%s71] sm:$0x1]
    %73 = vrot.lane.b32.xlu0 %v72, 32
    %v74 = vpop.permute.xlu0 %73
    %vm75 = vcmask 326912
    %76 = vst.msk [vmem:[#allocation0] sm:$0x1] %vm75, %v74
    %s77 = scalar_lea.vmem %s0, 3
    %v78 = vld [vmem:[%s77] sm:$0x1]
    %79 = vrot.lane.b32.xlu0 %v78, 24
    %v80 = vpop.permute.xlu0 %79
    %vm81 = vcmask 261312
    %82 = vst.msk [vmem:[#allocation0] sm:$0x1] %vm81, %v80
    %s83 = scalar_lea.vmem %s0, 2
    %v84 = vld [vmem:[%s83] sm:$0x1]
    %85 = vrot.lane.b32.xlu0 %v84, 16
    %v86 = vpop.permute.xlu0 %85
    %vm87 = vcmask 195712
    %88 = vst.msk [vmem:[#allocation0] sm:$0x1] %vm87, %v86
    %s89 = scalar_lea.vmem %s0, 1
    %v90 = vld [vmem:[%s89] sm:$0x1]
    %91 = vrot.lane.b32.xlu0 %v90, 8
    %v92 = vpop.permute.xlu0 %91
    %vm93 = vcmask 130112
    %94 = vst.msk [vmem:[#allocation0] sm:$0x1] %vm93, %v92
    %s96 = sshllo.u32 0, 1
    %v98 = vld [vmem:[#allocation0] sm:%s96]
    %s99 = sshllo.u32 0, 1
    %100 = vst [vmem:[%s1] sm:%s99] %v98

// kernel: mspam_basic_forward.1
$region0: #{mspam_basic_forward.1}
  #allocation0 [shape = 'u32[]', space=smem, size = 0x4, offset = 0x4, fixed_abs, tag = 'smem constant byte address 0x4 - core index']
  #allocation1 [shape = 'u32[144,128]{1,0:T(1,128)}', space=vmem, size = 0x12000, scoped, tag = 'internal scratch']
  #allocation2 [shape = 'f32[18,128]{1,0:T(8,128)}', space=vmem, size = 0x3000, scoped, tag = 'scratch operand']
  %s0 = inlined_call_operand.vmem [shape: f32[2,18,64], index: 0, kind: input, shape index: {}]
  %s1 = inlined_call_operand.vmem [shape: bf16[3,64,128], index: 1, kind: input, shape index: {}]
  %s2 = inlined_call_operand.vmem [shape: f32[1,128], index: 2, kind: input, shape index: {}]
  %s3 = inlined_call_operand.vmem [shape: bf16[3,128,128], index: 3, kind: input, shape index: {}]
  %s4 = inlined_call_operand.vmem [shape: f32[1,128], index: 4, kind: input, shape index: {}]
  %s5 = inlined_call_operand.vmem [shape: f32[2,16,128], index: 5, kind: output, shape index: {}]
  %s6 = sld [smem:[#allocation0]]
  $region53: #{mspam_basic_forward.1} parent=0
    _
  %s8 = ssub.s32 1, %s6
  %s9 = scalar_select 0, %s8, %s6
  loop: start=0, step=1, limit=4
  $region2: #{mspam_basic_forward.1} parent=0 // loop_pre_header
    _
  $region3: #{mspam_basic_forward.1} parent=0 // loop_header
    %s11 = sphi 0, %s15
    %p12 = scmp.ge.s32.totalorder %s11, 4
    %s21 = sphi 0, %s23
    %s24 = sphi 0, %s21
    %s25 = sphi 0, %s24
    %s41 = sphi 0, %s25
    %s45 = sphi 0, %s45
    %s47 = sphi 0, %s45
    %s48 = sphi 0, %s47
    %s62 = sphi 0, %s48
    %s66 = sphi 0, %s66
    %s68 = sphi 0, %s66
    %s69 = sphi 0, %s68
    %s83 = sphi 0, %s69
    %s87 = sphi 0, %s87
    %s89 = sphi 0, %s87
    %s90 = sphi 0, %s89
    %s104 = sphi 0, %s90
    %s108 = sphi 0, %s108
    %s110 = sphi 0, %s108
    %s111 = sphi 0, %s110
    %s125 = sphi 0, %s111
    %s131 = sphi 0, %s133
    %s134 = sphi 0, %s131
    %s135 = sphi 0, %s134
    %s151 = sphi 0, %s135
  $region4: #{mspam_basic_forward.1} parent=0 // loop_header_branch
    %14 = sbr.rel (%p12) target = $region8
  $region5: #{mspam_basic_forward.1} parent=0 // loop_body
    %s16 = ssub.s32 %s11, 1
    %s17 = ssub.s32 %s11, 2
    %s18 = sadd.s32 %s11, 1
    %s19 = ssub.s32 %s11, %s18
    %p20 = scmp.eq.s32.totalorder %s19, 0
    %s22 = sadd.s32 %s21, 1
    %s23 = scalar_select %p20, %s21, %s22
    %p26 = pneg %p20
    %p27 = scmp.eq.s32.totalorder %s11, 1
    %p28 = por %p26, %p27
    %p29 = scmp.ne.s32.totalorder %s21, %s24
    %p30 = scmp.eq.s32.totalorder %s11, 0
    %p31 = por %p29, %p30
    %p32 = scmp.ne.s32.totalorder %s21, %s24
    %p33 = scmp.eq.s32.totalorder %s16, 1
    %p34 = por %p32, %p33
    %p35 = scmp.ne.s32.totalorder %s24, %s25
    %p36 = scmp.eq.s32.totalorder %s16, 0
    %p37 = por %p35, %p36
    %p38 = scmp.ne.s32.totalorder %s24, %s25
    %p39 = scmp.eq.s32.totalorder %s17, 1
    %p40 = por %p38, %p39
    %p42 = scmp.ne.s32.totalorder %s25, %s41
    %p43 = scmp.eq.s32.totalorder %s17, 0
    %p44 = por %p42, %p43
    %s46 = sadd.s32 %s45, 1
    %p49 = scmp.eq.s32.totalorder %s11, 1
    %p50 = scmp.ne.s32.totalorder %s45, %s47
    %p51 = scmp.eq.s32.totalorder %s11, 0
    %p52 = por %p50, %p51
    %p53 = scmp.ne.s32.totalorder %s45, %s47
    %p54 = scmp.eq.s32.totalorder %s16, 1
    %p55 = por %p53, %p54
    %p56 = scmp.ne.s32.totalorder %s47, %s48
    %p57 = scmp.eq.s32.totalorder %s16, 0
    %p58 = por %p56, %p57
    %p59 = scmp.ne.s32.totalorder %s47, %s48
    %p60 = scmp.eq.s32.totalorder %s17, 1
    %p61 = por %p59, %p60
    %p63 = scmp.ne.s32.totalorder %s48, %s62
    %p64 = scmp.eq.s32.totalorder %s17, 0
    %p65 = por %p63, %p64
    %s67 = sadd.s32 %s66, 1
    %p70 = scmp.eq.s32.totalorder %s11, 1
    %p71 = scmp.ne.s32.totalorder %s66, %s68
    %p72 = scmp.eq.s32.totalorder %s11, 0
    %p73 = por %p71, %p72
    %p74 = scmp.ne.s32.totalorder %s66, %s68
    %p75 = scmp.eq.s32.totalorder %s16, 1
    %p76 = por %p74, %p75
    %p77 = scmp.ne.s32.totalorder %s68, %s69
    %p78 = scmp.eq.s32.totalorder %s16, 0
    %p79 = por %p77, %p78
    %p80 = scmp.ne.s32.totalorder %s68, %s69
    %p81 = scmp.eq.s32.totalorder %s17, 1
    %p82 = por %p80, %p81
    %p84 = scmp.ne.s32.totalorder %s69, %s83
    %p85 = scmp.eq.s32.totalorder %s17, 0
    %p86 = por %p84, %p85
    %s88 = sadd.s32 %s87, 1
    %p91 = scmp.eq.s32.totalorder %s11, 1
    %p92 = scmp.ne.s32.totalorder %s87, %s89
    %p93 = scmp.eq.s32.totalorder %s11, 0
    %p94 = por %p92, %p93
    %p95 = scmp.ne.s32.totalorder %s87, %s89
    %p96 = scmp.eq.s32.totalorder %s16, 1
    %p97 = por %p95, %p96
    %p98 = scmp.ne.s32.totalorder %s89, %s90
    %p99 = scmp.eq.s32.totalorder %s16, 0
    %p100 = por %p98, %p99
    %p101 = scmp.ne.s32.totalorder %s89, %s90
    %p102 = scmp.eq.s32.totalorder %s17, 1
    %p103 = por %p101, %p102
    %p105 = scmp.ne.s32.totalorder %s90, %s104
    %p106 = scmp.eq.s32.totalorder %s17, 0
    %p107 = por %p105, %p106
    %s109 = sadd.s32 %s108, 1
    %p112 = scmp.eq.s32.totalorder %s11, 1
    %p113 = scmp.ne.s32.totalorder %s108, %s110
    %p114 = scmp.eq.s32.totalorder %s11, 0
    %p115 = por %p113, %p114
    %p116 = scmp.ne.s32.totalorder %s108, %s110
    %p117 = scmp.eq.s32.totalorder %s16, 1
    %p118 = por %p116, %p117
    %p119 = scmp.ne.s32.totalorder %s110, %s111
    %p120 = scmp.eq.s32.totalorder %s16, 0
    %p121 = por %p119, %p120
    %p122 = scmp.ne.s32.totalorder %s110, %s111
    %p123 = scmp.eq.s32.totalorder %s17, 1
    %p124 = por %p122, %p123
    %p126 = scmp.ne.s32.totalorder %s111, %s125
    %p127 = scmp.eq.s32.totalorder %s17, 0
    %p128 = por %p126, %p127
    %s129 = ssub.s32 %s11, %s18
    %p130 = scmp.eq.s32.totalorder %s129, 0
    %s132 = sadd.s32 %s131, 1
    %s133 = scalar_select %p130, %s131, %s132
    %p136 = pneg %p130
    %p137 = scmp.eq.s32.totalorder %s11, 1
    %p138 = por %p136, %p137
    %p139 = scmp.ne.s32.totalorder %s131, %s134
    %p140 = scmp.eq.s32.totalorder %s11, 0
    %p141 = por %p139, %p140
    %p142 = scmp.ne.s32.totalorder %s131, %s134
    %p143 = scmp.eq.s32.totalorder %s16, 1
    %p144 = por %p142, %p143
    %p145 = scmp.ne.s32.totalorder %s134, %s135
    %p146 = scmp.eq.s32.totalorder %s16, 0
    %p147 = por %p145, %p146
    %p148 = scmp.ne.s32.totalorder %s134, %s135
    %p149 = scmp.eq.s32.totalorder %s17, 1
    %p150 = por %p148, %p149
    %p152 = scmp.ne.s32.totalorder %s135, %s151
    %p153 = scmp.eq.s32.totalorder %s17, 0
    %p154 = por %p152, %p153
    %p155 = scmp.le.s32.totalorder 1, %s11
    %p156 = scmp.lt.s32.totalorder %s11, 3
    %p157 = pnand %p155, %p156
    %p158 = pneg %p157
    // Predicated region
    $region9: #{mspam_basic_forward.1} parent=5 // pred_check
      _
    $region10: #{mspam_basic_forward.1} parent=5 // pred_check_branch
      %160 = sbr.rel (%p157) target = $region12
    $region11: #{mspam_basic_forward.1} parent=5 // pred_region
      %s161 = ssub.s32 %s11, 1
      // Predicated region
      $region13: #{mspam_basic_forward.1} parent=11 // pred_check
        %p162 = pneg %p58
      $region14: #{mspam_basic_forward.1} parent=11 // pred_check_branch
        %164 = sbr.rel (%p162) target = $region16
      $region15: #{mspam_basic_forward.1} parent=11 // pred_region
        _
      $region16: #{mspam_basic_forward.1} parent=11 // pred_fallthru
        _
      // Predicated region
      $region17: #{mspam_basic_forward.1} parent=11 // pred_check
        %p165 = pneg %p79
      $region18: #{mspam_basic_forward.1} parent=11 // pred_check_branch
        %167 = sbr.rel (%p165) target = $region20
      $region19: #{mspam_basic_forward.1} parent=11 // pred_region
        _
      $region20: #{mspam_basic_forward.1} parent=11 // pred_fallthru
        _
      // Predicated region
      $region21: #{mspam_basic_forward.1} parent=11 // pred_check
        %p168 = pneg %p100
      $region22: #{mspam_basic_forward.1} parent=11 // pred_check_branch
        %170 = sbr.rel (%p168) target = $region24
      $region23: #{mspam_basic_forward.1} parent=11 // pred_region
        _
      $region24: #{mspam_basic_forward.1} parent=11 // pred_fallthru
        _
      // Predicated region
      $region25: #{mspam_basic_forward.1} parent=11 // pred_check
        %p171 = pneg %p121
      $region26: #{mspam_basic_forward.1} parent=11 // pred_check_branch
        %173 = sbr.rel (%p171) target = $region28
      $region27: #{mspam_basic_forward.1} parent=11 // pred_region
        _
      $region28: #{mspam_basic_forward.1} parent=11 // pred_fallthru
        _
    $region12: #{mspam_basic_forward.1} parent=5 // pred_fallthru
      _
    %p174 = scmp.lt.s32.totalorder %s11, 2
    // Predicated region
    $region29: #{mspam_basic_forward.1} parent=5 // pred_check
      %p175 = pneg %p174
    $region30: #{mspam_basic_forward.1} parent=5 // pred_check_branch
      %177 = sbr.rel (%p175) target = $region32
    $region31: #{mspam_basic_forward.1} parent=5 // pred_region
      // Predicated region
      $region33: #{mspam_basic_forward.1} parent=31 // pred_check
        %p178 = pneg %p31
      $region34: #{mspam_basic_forward.1} parent=31 // pred_check_branch
        %180 = sbr.rel (%p178) target = $region36
      $region35: #{mspam_basic_forward.1} parent=31 // pred_region
        %p181 = scmp.lt.s32.totalorder %s11, 1
        %s182 = scalar_select %p181, %s11, 1
        %s183 = smul.addr %s182, 3
        %s184 = smul.addr %s183, 8
        %s185 = scalar_lea.vmem %s0, %s184
      $region36: #{mspam_basic_forward.1} parent=31 // pred_fallthru
        _
    $region32: #{mspam_basic_forward.1} parent=5 // pred_fallthru
      _
    %p186 = scmp.le.s32.totalorder 1, %s11
    %p187 = scmp.lt.s32.totalorder %s11, 3
    %p188 = pnand %p186, %p187
    %p189 = pneg %p188
    // Predicated region
    $region37: #{mspam_basic_forward.1} parent=5 // pred_check
      _
    $region38: #{mspam_basic_forward.1} parent=5 // pred_check_branch
      %191 = sbr.rel (%p188) target = $region40
    $region39: #{mspam_basic_forward.1} parent=5 // pred_region
      %s192 = ssub.s32 %s11, 1
      %p193 = scmp.lt.s32.totalorder %s16, 1
      %s194 = scalar_select %p193, %s16, 1
      %s195 = smul.addr %s194, 3
      %s196 = smul.addr %s195, 8
      %s197 = scalar_lea.vmem %s0, %s196
      %p198 = pneg %p37
      %p199 = pneg %p34
      %p200 = pneg %p58
      %p201 = pneg %p55
      %p202 = pneg %p79
      %p203 = pneg %p76
      %p204 = pneg %p100
      %p205 = pneg %p97
      %p206 = pneg %p121
      %p207 = pneg %p118
      %p208 = pneg %p147
      %p209 = pneg %p144
      %p210 = scmp.lt.s32.totalorder %s16, 1
      %s211 = scalar_select %p210, %s16, 1
      %s212 = smul.addr %s211, 2
      %s213 = smul.addr %s212, 8
      %s214 = scalar_lea.vmem %s5, %s213
      %p215 = scmp.lt.s32.totalorder %s16, 1
      %s216 = scalar_select %p215, %s16, 1
      %s217 = smul.addr %s216, 3
      %s218 = smul.addr %s217, 8
      %s219 = scalar_lea.vmem %s0, %s218
      %p220 = scmp.lt.s32.totalorder %s16, 1
      %s221 = scalar_select %p220, %s16, 1
      %s222 = smul.addr %s221, 2
      %s223 = smul.addr %s222, 8
      %s224 = scalar_lea.vmem %s5, %s223
      %v226 = vld [vmem:[%s219] sm:$0xff]
      %v227 = vld [vmem:[%s219 + $0x8] sm:$0xff]
      %v228 = vld [vmem:[%s219 + $0x10] sm:$0x3]
      %v229 = vpack.c.bf16 %v227, %v226
      %v230 = vpack.c.bf16 %v228, %v228
      %v231 = vld [vmem:[%s1] sm:$0xf]
      %v232 = vld [vmem:[%s1 + $0x4] sm:$0xf]
      %v233 = vld [vmem:[%s1 + $0x8] sm:$0xf]
      %v234 = vld [vmem:[%s1 + $0xc] sm:$0xf]
      %v235 = vld [vmem:[%s1 + $0x10] sm:$0xf]
      %v236 = vld [vmem:[%s1 + $0x14] sm:$0xf]
      %v237 = vld [vmem:[%s1 + $0x18] sm:$0xf]
      %v238 = vld [vmem:[%s1 + $0x1c] sm:$0xf]
      %s239 = scalar_lea.vmem %s1, 32
      %v240 = vld [vmem:[%s239] sm:$0xf]
      %v241 = vld [vmem:[%s239 + $0x4] sm:$0xf]
      %v242 = vld [vmem:[%s239 + $0x8] sm:$0xf]
      %v243 = vld [vmem:[%s239 + $0xc] sm:$0xf]
      %v244 = vld [vmem:[%s239 + $0x10] sm:$0xf]
      %v245 = vld [vmem:[%s239 + $0x14] sm:$0xf]
      %v246 = vld [vmem:[%s239 + $0x18] sm:$0xf]
      %v247 = vld [vmem:[%s239 + $0x1c] sm:$0xf]
      %vm248 = vsmask.f32 7424
      %v250 = vshrl.u32 %v229, 16
      %v252 = vshll.u32 %v229, 16
      %v254 = vrot.slane %v252, 1
      %v255 = vor.u32 %v250, %v254
      %v257 = vshll.u32 %v230, 16
      %v259 = vrot.slane %v257, 1
      %v260 = vsel %vm248, %v255, %v259
      %v269 = vunpack.c.l.b16 %v240
      %v270 = vunpack.c.l.b16 %v241
      %v271 = vunpack.c.l.b16 %v242
      %v272 = vunpack.c.l.b16 %v243
      %v273 = vunpack.c.l.b16 %v244
      %v274 = vunpack.c.l.b16 %v245
      %v275 = vunpack.c.l.b16 %v246
      %v276 = vunpack.c.l.b16 %v247
      %v277 = vpack.c.b16 %v270, %v269
      %v278 = vpack.c.b16 %v272, %v271
      %v279 = vpack.c.b16 %v274, %v273
      %v280 = vpack.c.b16 %v276, %v275
      %vm285 = vcmask 523264
      %v287 = vsel %vm285, %v260, 0
      %289 = vmatprep.subr.bf16.mxu0 0
      %290 = vmatpush1.bf16.msra.mxu0 %v277
      %291 = vmatprep.subr.bf16.mxu0 0
      %292 = vmatpush1.bf16.msra.mxu0 %v278
      %293 = vmatprep.subr.bf16.mxu0 0
      %294 = vmatpush1.bf16.msra.mxu0 %v279
      %295 = vmatprep.subr.bf16.mxu0 0
      %296 = vmatpush1.bf16.msra.mxu0 %v280
      %297 = vmatprep.subr.bf16.mxu0 0
      %298 = vmatpush1.bf16.msra.mxu0 0
      %299 = vmatprep.subr.bf16.mxu0 0
      %300 = vmatpush1.bf16.msra.mxu0 0
      %301 = vmatprep.subr.bf16.mxu0 0
      %302 = vmatpush1.bf16.msra.mxu0 0
      %303 = vmatprep.subr.bf16.mxu0 0
      %304 = vmatpush1.bf16.msra.mxu0 0
      %305 = vmatprep.subr.bf16.mxu0 0
      %306 = vmatpush1.bf16.msra.mxu0 0
      %307 = vmatprep.subr.bf16.mxu0 0
      %308 = vmatpush1.bf16.msra.mxu0 0
      %309 = vmatprep.subr.bf16.mxu0 0
      %310 = vmatpush1.bf16.msra.mxu0 0
      %311 = vmatprep.subr.bf16.mxu0 0
      %312 = vmatpush1.bf16.msra.mxu0 0
      %313 = vmatprep.subr.bf16.mxu0 0
      %314 = vmatpush1.bf16.msra.mxu0 0
      %315 = vmatprep.subr.bf16.mxu0 0
      %316 = vmatpush1.bf16.msra.mxu0 0
      %317 = vmatprep.subr.bf16.mxu0 0
      %318 = vmatpush1.bf16.msra.mxu0 0
      %319 = vmatprep.subr.bf16.mxu0 0
      %320 = vmatpush1.bf16.msra.mxu0 0
      %321 = vmatprep.mubr.bf16.mxu0 0
      %322 = vmatmul.mubr.bf16.gmra.mrb[0].mxu0 %v287
      %v323 = vpop.f32.mrb[0].mxu0
      %v324 = vadd.f32 0.0, %v323
      %v325 = vpop.f32.mrb[0].mxu0
      %v326 = vpop.f32.mrb[0].mxu0
      %v327 = vadd.f32 0.0, %v326
      %v328 = vpop.f32.mrb[0].mxu0
      %329 = vdwg.mxu0
      %v338 = vunpack.c.l.b16 %v231
      %v339 = vunpack.c.l.b16 %v232
      %v340 = vunpack.c.l.b16 %v233
      %v341 = vunpack.c.l.b16 %v234
      %v342 = vunpack.c.l.b16 %v235
      %v343 = vunpack.c.l.b16 %v236
      %v344 = vunpack.c.l.b16 %v237
      %v345 = vunpack.c.l.b16 %v238
      %v346 = vpack.c.b16 %v339, %v338
      %v347 = vpack.c.b16 %v341, %v340
      %v348 = vpack.c.b16 %v343, %v342
      %v349 = vpack.c.b16 %v345, %v344
      %v354 = vsel %vm285, %v229, 0
      %356 = vmatprep.subr.bf16.mxu0 0
      %357 = vmatpush1.bf16.msra.mxu0 %v346
      %358 = vmatprep.subr.bf16.mxu0 0
      %359 = vmatpush1.bf16.msra.mxu0 %v347
      %360 = vmatprep.subr.bf16.mxu0 0
      %361 = vmatpush1.bf16.msra.mxu0 %v348
      %362 = vmatprep.subr.bf16.mxu0 0
      %363 = vmatpush1.bf16.msra.mxu0 %v349
      %364 = vmatprep.subr.bf16.mxu0 0
      %365 = vmatpush1.bf16.msra.mxu0 0
      %366 = vmatprep.subr.bf16.mxu0 0
      %367 = vmatpush1.bf16.msra.mxu0 0
      %368 = vmatprep.subr.bf16.mxu0 0
      %369 = vmatpush1.bf16.msra.mxu0 0
      %370 = vmatprep.subr.bf16.mxu0 0
      %371 = vmatpush1.bf16.msra.mxu0 0
      %372 = vmatprep.subr.bf16.mxu0 0
      %373 = vmatpush1.bf16.msra.mxu0 0
      %374 = vmatprep.subr.bf16.mxu0 0
      %375 = vmatpush1.bf16.msra.mxu0 0
      %376 = vmatprep.subr.bf16.mxu0 0
      %377 = vmatpush1.bf16.msra.mxu0 0
      %378 = vmatprep.subr.bf16.mxu0 0
      %379 = vmatpush1.bf16.msra.mxu0 0
      %380 = vmatprep.subr.bf16.mxu0 0
      %381 = vmatpush1.bf16.msra.mxu0 0
      %382 = vmatprep.subr.bf16.mxu0 0
      %383 = vmatpush1.bf16.msra.mxu0 0
      %384 = vmatprep.subr.bf16.mxu0 0
      %385 = vmatpush1.bf16.msra.mxu0 0
      %386 = vmatprep.subr.bf16.mxu0 0
      %387 = vmatpush1.bf16.msra.mxu0 0
      %388 = vmatprep.mubr.bf16.mxu0 0
      %389 = vmatmul.mubr.bf16.gmra.mrb[0].mxu0 %v354
      %v390 = vpop.f32.mrb[0].mxu0
      %v391 = vadd.f32 %v324, %v390
      %v392 = vpop.f32.mrb[0].mxu0
      %v393 = vpop.f32.mrb[0].mxu0
      %v394 = vadd.f32 %v327, %v393
      %v395 = vpop.f32.mrb[0].mxu0
      %396 = vdwg.mxu0
      %s397 = scalar_lea.vmem %s1, 64
      %v398 = vld [vmem:[%s397] sm:$0xf]
      %v399 = vld [vmem:[%s397 + $0x4] sm:$0xf]
      %v400 = vld [vmem:[%s397 + $0x8] sm:$0xf]
      %v401 = vld [vmem:[%s397 + $0xc] sm:$0xf]
      %v402 = vld [vmem:[%s397 + $0x10] sm:$0xf]
      %v403 = vld [vmem:[%s397 + $0x14] sm:$0xf]
      %v404 = vld [vmem:[%s397 + $0x18] sm:$0xf]
      %v405 = vld [vmem:[%s397 + $0x1c] sm:$0xf]
      %vm408 = vcmask 1046528
      %v409 = vrot.slane %v229, 1
      %v410 = vrot.slane %v230, 1
      %v411 = vsel %vm408, %v409, %v410
      %v420 = vunpack.c.l.b16 %v398
      %v421 = vunpack.c.l.b16 %v399
      %v422 = vunpack.c.l.b16 %v400
      %v423 = vunpack.c.l.b16 %v401
      %v424 = vunpack.c.l.b16 %v402
      %v425 = vunpack.c.l.b16 %v403
      %v426 = vunpack.c.l.b16 %v404
      %v427 = vunpack.c.l.b16 %v405
      %v428 = vpack.c.b16 %v421, %v420
      %v429 = vpack.c.b16 %v423, %v422
      %v430 = vpack.c.b16 %v425, %v424
      %v431 = vpack.c.b16 %v427, %v426
      %v437 = vsel %vm285, %v411, 0
      %439 = vmatprep.subr.bf16.mxu0 0
      %440 = vmatpush1.bf16.msra.mxu0 %v428
      %441 = vmatprep.subr.bf16.mxu0 0
      %442 = vmatpush1.bf16.msra.mxu0 %v429
      %443 = vmatprep.subr.bf16.mxu0 0
      %444 = vmatpush1.bf16.msra.mxu0 %v430
      %445 = vmatprep.subr.bf16.mxu0 0
      %446 = vmatpush1.bf16.msra.mxu0 %v431
      %447 = vmatprep.subr.bf16.mxu0 0
      %448 = vmatpush1.bf16.msra.mxu0 0
      %449 = vmatprep.subr.bf16.mxu0 0
      %450 = vmatpush1.bf16.msra.mxu0 0
      %451 = vmatprep.subr.bf16.mxu0 0
      %452 = vmatpush1.bf16.msra.mxu0 0
      %453 = vmatprep.subr.bf16.mxu0 0
      %454 = vmatpush1.bf16.msra.mxu0 0
      %455 = vmatprep.subr.bf16.mxu0 0
      %456 = vmatpush1.bf16.msra.mxu0 0
      %457 = vmatprep.subr.bf16.mxu0 0
      %458 = vmatpush1.bf16.msra.mxu0 0
      %459 = vmatprep.subr.bf16.mxu0 0
      %460 = vmatpush1.bf16.msra.mxu0 0
      %461 = vmatprep.subr.bf16.mxu0 0
      %462 = vmatpush1.bf16.msra.mxu0 0
      %463 = vmatprep.subr.bf16.mxu0 0
      %464 = vmatpush1.bf16.msra.mxu0 0
      %465 = vmatprep.subr.bf16.mxu0 0
      %466 = vmatpush1.bf16.msra.mxu0 0
      %467 = vmatprep.subr.bf16.mxu0 0
      %468 = vmatpush1.bf16.msra.mxu0 0
      %469 = vmatprep.subr.bf16.mxu0 0
      %470 = vmatpush1.bf16.msra.mxu0 0
      %471 = vmatprep.mubr.bf16.mxu0 0
      %472 = vmatmul.mubr.bf16.gmra.mrb[0].mxu0 %v437
      %v473 = vpop.f32.mrb[0].mxu0
      %v474 = vadd.f32 0.0, %v473
      %v475 = vpop.f32.mrb[0].mxu0
      %v476 = vpop.f32.mrb[0].mxu0
      %v477 = vadd.f32 0.0, %v476
      %v478 = vpop.f32.mrb[0].mxu0
      %479 = vdwg.mxu0
      %v480 = vadd.f32 %v391, %v474
      %v481 = vadd.f32 %v394, %v477
      %v482 = vld [vmem:[%s2] sm:$0x1]
      %v484 = vlaneseq
      %v485 = vshrl.u32 %v484, 7
      %v486 = vsub.s32 0, %v485
      %v487 = vrot.slane %v482, %v486
      %v489 = vadd.f32 %v480, %v487
      %v490 = vadd.f32 %v481, %v487
      %v491 = vmax.f32 %v489, 0.0
      %v492 = vmax.f32 %v490, 0.0
      %493 = vst [vmem:[#allocation2] sm:$0xff] 0.0
      %494 = vst [vmem:[#allocation2 + $0x8] sm:$0xff] 0.0
      %495 = vst [vmem:[#allocation2 + $0x10] sm:$0x3] 0.0
      %496 = vst [vmem:[#allocation2 + $0x1] sm:$0xff] %v491
      %497 = vst [vmem:[#allocation2 + $0x9] sm:$0xff] %v492
      %v498 = vld [vmem:[#allocation2] sm:$0xff]
      %v499 = vld [vmem:[#allocation2 + $0x8] sm:$0xff]
      %v500 = vld [vmem:[#allocation2 + $0x10] sm:$0x3]
      %v501 = vpack.c.bf16 %v499, %v498
      %v502 = vpack.c.bf16 %v500, %v500
      %v503 = vld [vmem:[%s3] sm:$0xf]
      %v504 = vld [vmem:[%s3 + $0x4] sm:$0xf]
      %v505 = vld [vmem:[%s3 + $0x8] sm:$0xf]
      %v506 = vld [vmem:[%s3 + $0xc] sm:$0xf]
      %v507 = vld [vmem:[%s3 + $0x10] sm:$0xf]
      %v508 = vld [vmem:[%s3 + $0x14] sm:$0xf]
      %v509 = vld [vmem:[%s3 + $0x18] sm:$0xf]
      %v510 = vld [vmem:[%s3 + $0x1c] sm:$0xf]
      %v511 = vld [vmem:[%s3 + $0x20] sm:$0xf]
      %v512 = vld [vmem:[%s3 + $0x24] sm:$0xf]
      %v513 = vld [vmem:[%s3 + $0x28] sm:$0xf]
      %v514 = vld [vmem:[%s3 + $0x2c] sm:$0xf]
      %v515 = vld [vmem:[%s3 + $0x30] sm:$0xf]
      %v516 = vld [vmem:[%s3 + $0x34] sm:$0xf]
      %v517 = vld [vmem:[%s3 + $0x38] sm:$0xf]
      %v518 = vld [vmem:[%s3 + $0x3c] sm:$0xf]
      %s519 = scalar_lea.vmem %s3, 64
      %v520 = vld [vmem:[%s519] sm:$0xf]
      %v521 = vld [vmem:[%s519 + $0x4] sm:$0xf]
      %v522 = vld [vmem:[%s519 + $0x8] sm:$0xf]
      %v523 = vld [vmem:[%s519 + $0xc] sm:$0xf]
      %v524 = vld [vmem:[%s519 + $0x10] sm:$0xf]
      %v525 = vld [vmem:[%s519 + $0x14] sm:$0xf]
      %v526 = vld [vmem:[%s519 + $0x18] sm:$0xf]
      %v527 = vld [vmem:[%s519 + $0x1c] sm:$0xf]
      %v528 = vld [vmem:[%s519 + $0x20] sm:$0xf]
      %v529 = vld [vmem:[%s519 + $0x24] sm:$0xf]
      %v530 = vld [vmem:[%s519 + $0x28] sm:$0xf]
      %v531 = vld [vmem:[%s519 + $0x2c] sm:$0xf]
      %v532 = vld [vmem:[%s519 + $0x30] sm:$0xf]
      %v533 = vld [vmem:[%s519 + $0x34] sm:$0xf]
      %v534 = vld [vmem:[%s519 + $0x38] sm:$0xf]
      %v535 = vld [vmem:[%s519 + $0x3c] sm:$0xf]
      %v537 = vshrl.u32 %v501, 16
      %v539 = vshll.u32 %v501, 16
      %v541 = vrot.slane %v539, 1
      %v542 = vor.u32 %v537, %v541
      %v544 = vshll.u32 %v502, 16
      %v546 = vrot.slane %v544, 1
      %v547 = vsel %vm248, %v542, %v546
      %v565 = vunpack.c.l.b16 %v520
      %v566 = vunpack.c.l.b16 %v521
      %v567 = vunpack.c.l.b16 %v522
      %v568 = vunpack.c.l.b16 %v523
      %v569 = vunpack.c.l.b16 %v524
      %v570 = vunpack.c.l.b16 %v525
      %v571 = vunpack.c.l.b16 %v526
      %v572 = vunpack.c.l.b16 %v527
      %v573 = vunpack.c.l.b16 %v528
      %v574 = vunpack.c.l.b16 %v529
      %v575 = vunpack.c.l.b16 %v530
      %v576 = vunpack.c.l.b16 %v531
      %v577 = vunpack.c.l.b16 %v532
      %v578 = vunpack.c.l.b16 %v533
      %v579 = vunpack.c.l.b16 %v534
      %v580 = vunpack.c.l.b16 %v535
      %v581 = vpack.c.b16 %v566, %v565
      %v582 = vpack.c.b16 %v568, %v567
      %v583 = vpack.c.b16 %v570, %v569
      %v584 = vpack.c.b16 %v572, %v571
      %v585 = vpack.c.b16 %v574, %v573
      %v586 = vpack.c.b16 %v576, %v575
      %v587 = vpack.c.b16 %v578, %v577
      %v588 = vpack.c.b16 %v580, %v579
      %597 = vmatprep.subr.bf16.mxu0 0
      %598 = vmatpush1.bf16.msra.mxu0 %v581
      %599 = vmatprep.subr.bf16.mxu0 0
      %600 = vmatpush1.bf16.msra.mxu0 %v582
      %601 = vmatprep.subr.bf16.mxu0 0
      %602 = vmatpush1.bf16.msra.mxu0 %v583
      %603 = vmatprep.subr.bf16.mxu0 0
      %604 = vmatpush1.bf16.msra.mxu0 %v584
      %605 = vmatprep.subr.bf16.mxu0 0
      %606 = vmatpush1.bf16.msra.mxu0 %v585
      %607 = vmatprep.subr.bf16.mxu0 0
      %608 = vmatpush1.bf16.msra.mxu0 %v586
      %609 = vmatprep.subr.bf16.mxu0 0
      %610 = vmatpush1.bf16.msra.mxu0 %v587
      %611 = vmatprep.subr.bf16.mxu0 0
      %612 = vmatpush1.bf16.msra.mxu0 %v588
      %613 = vmatprep.subr.bf16.mxu0 0
      %614 = vmatpush1.bf16.msra.mxu0 0
      %615 = vmatprep.subr.bf16.mxu0 0
      %616 = vmatpush1.bf16.msra.mxu0 0
      %617 = vmatprep.subr.bf16.mxu0 0
      %618 = vmatpush1.bf16.msra.mxu0 0
      %619 = vmatprep.subr.bf16.mxu0 0
      %620 = vmatpush1.bf16.msra.mxu0 0
      %621 = vmatprep.subr.bf16.mxu0 0
      %622 = vmatpush1.bf16.msra.mxu0 0
      %623 = vmatprep.subr.bf16.mxu0 0
      %624 = vmatpush1.bf16.msra.mxu0 0
      %625 = vmatprep.subr.bf16.mxu0 0
      %626 = vmatpush1.bf16.msra.mxu0 0
      %627 = vmatprep.subr.bf16.mxu0 0
      %628 = vmatpush1.bf16.msra.mxu0 0
      %629 = vmatprep.mubr.bf16.mxu0 0
      %630 = vmatmul.mubr.bf16.gmra.mrb[0].mxu0 %v547
      %v631 = vpop.f32.mrb[0].mxu0
      %v632 = vadd.f32 0.0, %v631
      %v633 = vpop.f32.mrb[0].mxu0
      %v634 = vpop.f32.mrb[0].mxu0
      %v635 = vadd.f32 0.0, %v634
      %v636 = vpop.f32.mrb[0].mxu0
      %637 = vdwg.mxu0
      %v654 = vunpack.c.l.b16 %v503
      %v655 = vunpack.c.l.b16 %v504
      %v656 = vunpack.c.l.b16 %v505
      %v657 = vunpack.c.l.b16 %v506
      %v658 = vunpack.c.l.b16 %v507
      %v659 = vunpack.c.l.b16 %v508
      %v660 = vunpack.c.l.b16 %v509
      %v661 = vunpack.c.l.b16 %v510
      %v662 = vunpack.c.l.b16 %v511
      %v663 = vunpack.c.l.b16 %v512
      %v664 = vunpack.c.l.b16 %v513
      %v665 = vunpack.c.l.b16 %v514
      %v666 = vunpack.c.l.b16 %v515
      %v667 = vunpack.c.l.b16 %v516
      %v668 = vunpack.c.l.b16 %v517
      %v669 = vunpack.c.l.b16 %v518
      %v670 = vpack.c.b16 %v655, %v654
      %v671 = vpack.c.b16 %v657, %v656
      %v672 = vpack.c.b16 %v659, %v658
      %v673 = vpack.c.b16 %v661, %v660
      %v674 = vpack.c.b16 %v663, %v662
      %v675 = vpack.c.b16 %v665, %v664
      %v676 = vpack.c.b16 %v667, %v666
      %v677 = vpack.c.b16 %v669, %v668
      %686 = vmatprep.subr.bf16.mxu0 0
      %687 = vmatpush1.bf16.msra.mxu0 %v670
      %688 = vmatprep.subr.bf16.mxu0 0
      %689 = vmatpush1.bf16.msra.mxu0 %v671
      %690 = vmatprep.subr.bf16.mxu0 0
      %691 = vmatpush1.bf16.msra.mxu0 %v672
      %692 = vmatprep.subr.bf16.mxu0 0
      %693 = vmatpush1.bf16.msra.mxu0 %v673
      %694 = vmatprep.subr.bf16.mxu0 0
      %695 = vmatpush1.bf16.msra.mxu0 %v674
      %696 = vmatprep.subr.bf16.mxu0 0
      %697 = vmatpush1.bf16.msra.mxu0 %v675
      %698 = vmatprep.subr.bf16.mxu0 0
      %699 = vmatpush1.bf16.msra.mxu0 %v676
      %700 = vmatprep.subr.bf16.mxu0 0
      %701 = vmatpush1.bf16.msra.mxu0 %v677
      %702 = vmatprep.subr.bf16.mxu0 0
      %703 = vmatpush1.bf16.msra.mxu0 0
      %704 = vmatprep.subr.bf16.mxu0 0
      %705 = vmatpush1.bf16.msra.mxu0 0
      %706 = vmatprep.subr.bf16.mxu0 0
      %707 = vmatpush1.bf16.msra.mxu0 0
      %708 = vmatprep.subr.bf16.mxu0 0
      %709 = vmatpush1.bf16.msra.mxu0 0
      %710 = vmatprep.subr.bf16.mxu0 0
      %711 = vmatpush1.bf16.msra.mxu0 0
      %712 = vmatprep.subr.bf16.mxu0 0
      %713 = vmatpush1.bf16.msra.mxu0 0
      %714 = vmatprep.subr.bf16.mxu0 0
      %715 = vmatpush1.bf16.msra.mxu0 0
      %716 = vmatprep.subr.bf16.mxu0 0
      %717 = vmatpush1.bf16.msra.mxu0 0
      %718 = vmatprep.mubr.bf16.mxu0 0
      %719 = vmatmul.mubr.bf16.gmra.mrb[0].mxu0 %v501
      %v720 = vpop.f32.mrb[0].mxu0
      %v721 = vadd.f32 %v632, %v720
      %v722 = vpop.f32.mrb[0].mxu0
      %v723 = vpop.f32.mrb[0].mxu0
      %v724 = vadd.f32 %v635, %v723
      %v725 = vpop.f32.mrb[0].mxu0
      %726 = vdwg.mxu0
      %s727 = scalar_lea.vmem %s3, 128
      %v728 = vld [vmem:[%s727] sm:$0xf]
      %v729 = vld [vmem:[%s727 + $0x4] sm:$0xf]
      %v730 = vld [vmem:[%s727 + $0x8] sm:$0xf]
      %v731 = vld [vmem:[%s727 + $0xc] sm:$0xf]
      %v732 = vld [vmem:[%s727 + $0x10] sm:$0xf]
      %v733 = vld [vmem:[%s727 + $0x14] sm:$0xf]
      %v734 = vld [vmem:[%s727 + $0x18] sm:$0xf]
      %v735 = vld [vmem:[%s727 + $0x1c] sm:$0xf]
      %v736 = vld [vmem:[%s727 + $0x20] sm:$0xf]
      %v737 = vld [vmem:[%s727 + $0x24] sm:$0xf]
      %v738 = vld [vmem:[%s727 + $0x28] sm:$0xf]
      %v739 = vld [vmem:[%s727 + $0x2c] sm:$0xf]
      %v740 = vld [vmem:[%s727 + $0x30] sm:$0xf]
      %v741 = vld [vmem:[%s727 + $0x34] sm:$0xf]
      %v742 = vld [vmem:[%s727 + $0x38] sm:$0xf]
      %v743 = vld [vmem:[%s727 + $0x3c] sm:$0xf]
      %v746 = vrot.slane %v501, 1
      %v747 = vrot.slane %v502, 1
      %v748 = vsel %vm408, %v746, %v747
      %v766 = vunpack.c.l.b16 %v728
      %v767 = vunpack.c.l.b16 %v729
      %v768 = vunpack.c.l.b16 %v730
      %v769 = vunpack.c.l.b16 %v731
      %v770 = vunpack.c.l.b16 %v732
      %v771 = vunpack.c.l.b16 %v733
      %v772 = vunpack.c.l.b16 %v734
      %v773 = vunpack.c.l.b16 %v735
      %v774 = vunpack.c.l.b16 %v736
      %v775 = vunpack.c.l.b16 %v737
      %v776 = vunpack.c.l.b16 %v738
      %v777 = vunpack.c.l.b16 %v739
      %v778 = vunpack.c.l.b16 %v740
      %v779 = vunpack.c.l.b16 %v741
      %v780 = vunpack.c.l.b16 %v742
      %v781 = vunpack.c.l.b16 %v743
      %v782 = vpack.c.b16 %v767, %v766
      %v783 = vpack.c.b16 %v769, %v768
      %v784 = vpack.c.b16 %v771, %v770
      %v785 = vpack.c.b16 %v773, %v772
      %v786 = vpack.c.b16 %v775, %v774
      %v787 = vpack.c.b16 %v777, %v776
      %v788 = vpack.c.b16 %v779, %v778
      %v789 = vpack.c.b16 %v781, %v780
      %798 = vmatprep.subr.bf16.mxu0 0
      %799 = vmatpush1.bf16.msra.mxu0 %v782
      %800 = vmatprep.subr.bf16.mxu0 0
      %801 = vmatpush1.bf16.msra.mxu0 %v783
      %802 = vmatprep.subr.bf16.mxu0 0
      %803 = vmatpush1.bf16.msra.mxu0 %v784
      %804 = vmatprep.subr.bf16.mxu0 0
      %805 = vmatpush1.bf16.msra.mxu0 %v785
      %806 = vmatprep.subr.bf16.mxu0 0
      %807 = vmatpush1.bf16.msra.mxu0 %v786
      %808 = vmatprep.subr.bf16.mxu0 0
      %809 = vmatpush1.bf16.msra.mxu0 %v787
      %810 = vmatprep.subr.bf16.mxu0 0
      %811 = vmatpush1.bf16.msra.mxu0 %v788
      %812 = vmatprep.subr.bf16.mxu0 0
      %813 = vmatpush1.bf16.msra.mxu0 %v789
      %814 = vmatprep.subr.bf16.mxu0 0
      %815 = vmatpush1.bf16.msra.mxu0 0
      %816 = vmatprep.subr.bf16.mxu0 0
      %817 = vmatpush1.bf16.msra.mxu0 0
      %818 = vmatprep.subr.bf16.mxu0 0
      %819 = vmatpush1.bf16.msra.mxu0 0
      %820 = vmatprep.subr.bf16.mxu0 0
      %821 = vmatpush1.bf16.msra.mxu0 0
      %822 = vmatprep.subr.bf16.mxu0 0
      %823 = vmatpush1.bf16.msra.mxu0 0
      %824 = vmatprep.subr.bf16.mxu0 0
      %825 = vmatpush1.bf16.msra.mxu0 0
      %826 = vmatprep.subr.bf16.mxu0 0
      %827 = vmatpush1.bf16.msra.mxu0 0
      %828 = vmatprep.subr.bf16.mxu0 0
      %829 = vmatpush1.bf16.msra.mxu0 0
      %830 = vmatprep.mubr.bf16.mxu0 0
      %831 = vmatmul.mubr.bf16.gmra.mrb[0].mxu0 %v748
      %v832 = vpop.f32.mrb[0].mxu0
      %v833 = vadd.f32 0.0, %v832
      %v834 = vpop.f32.mrb[0].mxu0
      %v835 = vpop.f32.mrb[0].mxu0
      %v836 = vadd.f32 0.0, %v835
      %v837 = vpop.f32.mrb[0].mxu0
      %838 = vdwg.mxu0
      %v839 = vadd.f32 %v721, %v833
      %v840 = vadd.f32 %v724, %v836
      %v841 = vld [vmem:[%s4] sm:$0x1]
      %v843 = vlaneseq
      %v844 = vshrl.u32 %v843, 7
      %v845 = vsub.s32 0, %v844
      %v846 = vrot.slane %v841, %v845
      %v848 = vadd.f32 %v839, %v846
      %v849 = vadd.f32 %v840, %v846
      %v850 = vmax.f32 %v848, 0.0
      %v851 = vmax.f32 %v849, 0.0
      %852 = vst [vmem:[%s224] sm:$0xff] %v850
      %853 = vst [vmem:[%s224 + $0x8] sm:$0xff] %v851
      %p854 = scmp.lt.s32.totalorder %s16, 1
      %s855 = scalar_select %p854, %s16, 1
      %s856 = smul.addr %s855, 2
      %s857 = smul.addr %s856, 8
      %s858 = scalar_lea.vmem %s5, %s857
      // Predicated region
      $region41: #{mspam_basic_forward.1} parent=39 // pred_check
        %p859 = pneg %p144
      $region42: #{mspam_basic_forward.1} parent=39 // pred_check_branch
        %861 = sbr.rel (%p859) target = $region44
      $region43: #{mspam_basic_forward.1} parent=39 // pred_region
        _
      $region44: #{mspam_basic_forward.1} parent=39 // pred_fallthru
        _
    $region40: #{mspam_basic_forward.1} parent=5 // pred_fallthru
      _
    %p862 = scmp.le.s32.totalorder 2, %s11
    // Predicated region
    $region45: #{mspam_basic_forward.1} parent=5 // pred_check
      %p863 = pneg %p862
    $region46: #{mspam_basic_forward.1} parent=5 // pred_check_branch
      %865 = sbr.rel (%p863) target = $region48
    $region47: #{mspam_basic_forward.1} parent=5 // pred_region
      %s866 = ssub.s32 %s11, 2
      // Predicated region
      $region49: #{mspam_basic_forward.1} parent=47 // pred_check
        %p867 = pneg %p150
      $region50: #{mspam_basic_forward.1} parent=47 // pred_check_branch
        %869 = sbr.rel (%p867) target = $region52
      $region51: #{mspam_basic_forward.1} parent=47 // pred_region
        %p870 = scmp.lt.s32.totalorder %s17, 1
        %s871 = scalar_select %p870, %s17, 1
        %s872 = smul.addr %s871, 2
        %s873 = smul.addr %s872, 8
        %s874 = scalar_lea.vmem %s5, %s873
      $region52: #{mspam_basic_forward.1} parent=47 // pred_fallthru
        _
    $region48: #{mspam_basic_forward.1} parent=5 // pred_fallthru
      _
  $region6: #{mspam_basic_forward.1} parent=0 // loop_footer
    %s15 = sadd.s32 1, %s11
  $region7: #{mspam_basic_forward.1} parent=0 // loop_footer_branch
    %10 = sbr.rel target = $region3
  $region8: #{mspam_basic_forward.1} parent=0 // loop_exit
    _

</llo_original>
